<compile_context>
chip_gen: v6e
topology: v6e:2x2x1
jax: 0.10.0
libtpu: 0.0.40
codegen_flags: <defaults>
</compile_context>

<pallas_src>
import jax
import jax.numpy as jnp
from jax.experimental import pallas as pl
from jax.experimental.pallas import tpu as pltpu


def _pick_lane_tile(total, rows, n_bufs, budget_bytes=8 * 1024 * 1024):
    """Last-dim (lane) tile: full dim when small; otherwise a multiple of 128
    sized so rows * tile * 4 bytes * n_bufs stays within budget_bytes."""
    if total <= 512:
        return int(total)
    cap = (budget_bytes // max(rows * 4 * n_bufs, 1)) // 128 * 128
    cap = min(max(cap, 128), 4096)
    tile = min(cap, (total // 128) * 128)
    return int(max(tile, 128))


def cbam_forward(x_nchw, w1, b1, w2, b2):
    """CBAM channel attention.

    x_nchw: (B, C, H, W) f32.
    Weights stored (in, out): w1 (C, F), b1 (F,), w2 (F, C), b2 (C,).
    """
    B, C, H, W = x_nchw.shape
    HW = H * W
    F = w1.shape[1]
    rows = B * C

    x3 = x_nchw.reshape(B, C, HW)

    # ----------------- Pass 1: max/mean pooling over HW + shared MLP --------
    thw1 = _pick_lane_tile(HW, rows, n_bufs=2)
    n_hw1 = pl.cdiv(HW, thw1)
    ragged1 = (HW % thw1) != 0

    def pool_mlp_kernel(x_ref, w1_ref, b1_ref, w2_ref, b2_ref, attn_ref,
                        max_sc, sum_sc):
        h = pl.program_id(0)

        @pl.when(h == 0)
        def _init():
            max_sc[...] = jnp.full_like(max_sc, -jnp.inf)
            sum_sc[...] = jnp.zeros_like(sum_sc)

        x = x_ref[...]                                   # (B, C, thw1)
        if ragged1:
            lane = jax.lax.broadcasted_iota(jnp.int32, x.shape, 2)
            valid = (h * thw1 + lane) < HW
            xm = jnp.where(valid, x, -jnp.inf)
            xs = jnp.where(valid, x, 0.0)
        else:
            xm = x
            xs = x

        # One read of x per tile feeds both reductions (lane reductions -> XLU).
        max_sc[...] = jnp.maximum(max_sc[...], jnp.max(xm, axis=-1))
        sum_sc[...] = sum_sc[...] + jnp.sum(xs, axis=-1)

        @pl.when(h == pl.num_programs(0) - 1)
        def _finalize():
            mp = max_sc[...]                             # (B, C)
            ap = sum_sc[...] * jnp.float32(1.0 / HW)     # mean via mul, not div
            w1v = w1_ref[...]
            b1v = b1_ref[...]
            w2v = w2_ref[...]
            b2v = b2_ref[...]
            h_mp = jnp.maximum(
                jnp.dot(mp, w1v, preferred_element_type=jnp.float32) + b1v, 0.0)
            h_ap = jnp.maximum(
                jnp.dot(ap, w1v, preferred_element_type=jnp.float32) + b1v, 0.0)
            # Second Linear shared across both branches:
            # (a@W2 + b2) + (c@W2 + b2) == (a + c)@W2 + 2*b2
            score = jnp.dot(h_mp + h_ap, w2v,
                            preferred_element_type=jnp.float32) + 2.0 * b2v
            attn_ref[...] = jax.nn.sigmoid(score)

    attn = pl.pallas_call(
        pool_mlp_kernel,
        out_shape=jax.ShapeDtypeStruct((B, C), jnp.float32),
        grid=(n_hw1,),
        in_specs=[
            pl.BlockSpec((B, C, thw1), lambda h: (0, 0, h)),
            pl.BlockSpec((C, F), lambda h: (0, 0)),
            pl.BlockSpec((1, F), lambda h: (0, 0)),
            pl.BlockSpec((F, C), lambda h: (0, 0)),
            pl.BlockSpec((1, C), lambda h: (0, 0)),
        ],
        out_specs=pl.BlockSpec((B, C), lambda h: (0, 0)),
        scratch_shapes=[pltpu.VMEM((B, C), jnp.float32),
                        pltpu.VMEM((B, C), jnp.float32)],
        compiler_params=pltpu.CompilerParams(
            dimension_semantics=("arbitrary",)),
    )(x3, w1, b1.reshape(1, F), w2, b2.reshape(1, C))

    # ----------------- Pass 2: o = x * attn (broadcast over spatial) --------
    x2 = x3.reshape(rows, HW)          # fold (B, C) into sublanes: full vregs
    attn2 = attn.reshape(rows, 1)

    tr = rows if rows <= 1024 else 1024          # multiple of 8 when tiled
    thw2 = _pick_lane_tile(HW, tr, n_bufs=4)     # x + out, double-buffered
    grid2 = (pl.cdiv(rows, tr), pl.cdiv(HW, thw2))

    def scale_kernel(x_ref, a_ref, o_ref):
        o_ref[...] = x_ref[...] * a_ref[...]

    out2 = pl.pallas_call(
        scale_kernel,
        out_shape=jax.ShapeDtypeStruct((rows, HW), jnp.float32),
        grid=grid2,
        in_specs=[
            pl.BlockSpec((tr, thw2), lambda r, h: (r, h)),
            pl.BlockSpec((tr, 1), lambda r, h: (r, 0)),
        ],
        out_specs=pl.BlockSpec((tr, thw2), lambda r, h: (r, h)),
        compiler_params=pltpu.CompilerParams(
            dimension_semantics=("parallel", "parallel")),
    )(x2, attn2)

    return out2.reshape(B, C, H, W)


def init_params(key, input_channel, filter_channel):
    """nn.Linear-style init (uniform +/- 1/sqrt(fan_in)); weights stored (in, out)."""
    k1, k2, k3, k4 = jax.random.split(key, 4)
    bound1 = 1.0 / jnp.sqrt(input_channel)
    bound2 = 1.0 / jnp.sqrt(filter_channel)
    w1 = jax.random.uniform(k1, (input_channel, filter_channel),
                            jnp.float32, -bound1, bound1)
    b1 = jax.random.uniform(k2, (filter_channel,), jnp.float32, -bound1, bound1)
    w2 = jax.random.uniform(k3, (filter_channel, input_channel),
                            jnp.float32, -bound2, bound2)
    b2 = jax.random.uniform(k4, (input_channel,), jnp.float32, -bound2, bound2)
    return w1, b1, w2, b2


def cbam_reference(x, w1, b1, w2, b2):
    """Plain-JAX reference mirroring the PyTorch forward."""
    mp = jnp.max(x, axis=(2, 3))
    ap = jnp.mean(x, axis=(2, 3))

    def mlp(v):
        h = jnp.maximum(v @ w1 + b1, 0.0)
        return h @ w2 + b2

    attn = jax.nn.sigmoid(mlp(mp) + mlp(ap))
    return x * attn[:, :, None, None]


def _run_case(key, B, C, H, W, F):
    kx, kp = jax.random.split(key)
    x = jax.random.normal(kx, (B, C, H, W), jnp.float32)
    w1, b1, w2, b2 = init_params(kp, C, F)
    out = jax.block_until_ready(cbam_forward(x, w1, b1, w2, b2))
    ref = cbam_reference(x, w1, b1, w2, b2)
    assert out.shape == (B, C, H, W)
    assert jnp.allclose(out, ref, atol=3e-5, rtol=1e-5), (
        f"mismatch vs reference for shape {(B, C, H, W)}")


if __name__ == "__main__":
    key = jax.random.PRNGKey(0)
    k1, k2, k3 = jax.random.split(key, 3)

    # Spec-consistent small shape: input_channel=4, filter_channel=8.
    _run_case(k1, B=2, C=4, H=16, W=16, F=8)
    # Larger spatial extent -> multi-tile reduction grid (4 tiles of 4096 lanes).
    _run_case(k2, B=2, C=4, H=128, W=128, F=8)
    # Ragged spatial extent (56x56 = 3136, not a multiple of the lane tile).
    _run_case(k3, B=2, C=8, H=56, W=56, F=4)

    print("KERNEL_OK")
</pallas_src>

<mosaic_0001>
module attributes {stable_mosaic.version = 11 : i64} {
  func.func @pool_mlp_kernel(%arg0: i32, %arg1: memref<2x4x256xf32, #tpu.memory_space<vmem>>, %arg2: memref<4x8xf32, #tpu.memory_space<vmem>>, %arg3: memref<1x8xf32, #tpu.memory_space<vmem>>, %arg4: memref<8x4xf32, #tpu.memory_space<vmem>>, %arg5: memref<1x4xf32, #tpu.memory_space<vmem>>, %arg6: memref<2x4xf32, #tpu.memory_space<vmem>>, %arg7: memref<2x4xf32, #tpu.memory_space<vmem>>, %arg8: memref<2x4xf32, #tpu.memory_space<vmem>>) attributes {dimension_semantics = [#tpu.dimension_semantics<arbitrary>], iteration_bounds = array<i64: 1>, scalar_prefetch = 0 : i64, scratch_operands = 2 : i64, tpu.core_type = #tpu.core_type<tc>, window_params = [{transform_indices = @transform_0, window_bounds = array<i64: 2, 4, 256>}, {pipeline_mode = #tpu.pipeline_mode<synchronous>, transform_indices = @transform_1, window_bounds = array<i64: 4, 8>}, {pipeline_mode = #tpu.pipeline_mode<synchronous>, transform_indices = @transform_2, window_bounds = array<i64: 1, 8>}, {pipeline_mode = #tpu.pipeline_mode<synchronous>, transform_indices = @transform_3, window_bounds = array<i64: 8, 4>}, {pipeline_mode = #tpu.pipeline_mode<synchronous>, transform_indices = @transform_4, window_bounds = array<i64: 1, 4>}, {pipeline_mode = #tpu.pipeline_mode<synchronous>, transform_indices = @transform_5, window_bounds = array<i64: 2, 4>}]} {
    %c0_i32 = arith.constant 0 : i32
    %0 = arith.cmpi eq, %arg0, %c0_i32 : i32
    %1 = arith.extui %0 : i1 to i32
    %c0_i32_0 = arith.constant 0 : i32
    %2 = arith.cmpi ne, %1, %c0_i32_0 : i32
    scf.if %2 {
      %cst_14 = arith.constant 0xFF800000 : f32
      %15 = vector.broadcast %cst_14 : f32 to vector<2x4xf32>
      %c0_15 = arith.constant 0 : index
      %c0_16 = arith.constant 0 : index
      %16 = vector.load %arg7[%c0_15, %c0_16] : memref<2x4xf32, #tpu.memory_space<vmem>>, vector<2x4xf32>
      tpu.vector_store %arg7[%c0_15, %c0_16], %15 {strides = array<i32>} : memref<2x4xf32, #tpu.memory_space<vmem>>, vector<2x4xf32>,
      %cst_17 = arith.constant 0.000000e+00 : f32
      %17 = vector.broadcast %cst_17 : f32 to vector<2x4xf32>
      %c0_18 = arith.constant 0 : index
      %c0_19 = arith.constant 0 : index
      %18 = vector.load %arg8[%c0_18, %c0_19] : memref<2x4xf32, #tpu.memory_space<vmem>>, vector<2x4xf32>
      tpu.vector_store %arg8[%c0_18, %c0_19], %17 {strides = array<i32>} : memref<2x4xf32, #tpu.memory_space<vmem>>, vector<2x4xf32>,
    } else {
    }
    %c0 = arith.constant 0 : index
    %c0_1 = arith.constant 0 : index
    %c0_2 = arith.constant 0 : index
    %3 = vector.load %arg1[%c0, %c0_1, %c0_2] : memref<2x4x256xf32, #tpu.memory_space<vmem>>, vector<2x4x256xf32>
    %c0_3 = arith.constant 0 : index
    %c0_4 = arith.constant 0 : index
    %4 = vector.load %arg7[%c0_3, %c0_4] : memref<2x4xf32, #tpu.memory_space<vmem>>, vector<2x4xf32>
    %cst = arith.constant dense<0xFF800000> : vector<2x4xf32>
    %5 = vector.multi_reduction <maximumf>, %3, %cst [2] : vector<2x4x256xf32> to vector<2x4xf32>
    %6 = arith.maximumf %4, %5 : vector<2x4xf32>
    %c0_5 = arith.constant 0 : index
    %c0_6 = arith.constant 0 : index
    %7 = vector.load %arg7[%c0_5, %c0_6] : memref<2x4xf32, #tpu.memory_space<vmem>>, vector<2x4xf32>
    tpu.vector_store %arg7[%c0_5, %c0_6], %6 {strides = array<i32>} : memref<2x4xf32, #tpu.memory_space<vmem>>, vector<2x4xf32>,
    %c0_7 = arith.constant 0 : index
    %c0_8 = arith.constant 0 : index
    %8 = vector.load %arg8[%c0_7, %c0_8] : memref<2x4xf32, #tpu.memory_space<vmem>>, vector<2x4xf32>
    %cst_9 = arith.constant dense<0.000000e+00> : vector<2x4xf32>
    %9 = vector.multi_reduction <add>, %3, %cst_9 [2] : vector<2x4x256xf32> to vector<2x4xf32>
    %10 = arith.addf %8, %9 : vector<2x4xf32>
    %c0_10 = arith.constant 0 : index
    %c0_11 = arith.constant 0 : index
    %11 = vector.load %arg8[%c0_10, %c0_11] : memref<2x4xf32, #tpu.memory_space<vmem>>, vector<2x4xf32>
    tpu.vector_store %arg8[%c0_10, %c0_11], %10 {strides = array<i32>} : memref<2x4xf32, #tpu.memory_space<vmem>>, vector<2x4xf32>,
    %c0_i32_12 = arith.constant 0 : i32
    %12 = arith.cmpi eq, %arg0, %c0_i32_12 : i32
    %13 = arith.extui %12 : i1 to i32
    %c0_i32_13 = arith.constant 0 : i32
    %14 = arith.cmpi ne, %13, %c0_i32_13 : i32
    scf.if %14 {
      %c0_14 = arith.constant 0 : index
      %c0_15 = arith.constant 0 : index
      %15 = vector.load %arg7[%c0_14, %c0_15] : memref<2x4xf32, #tpu.memory_space<vmem>>, vector<2x4xf32>
      %c0_16 = arith.constant 0 : index
      %c0_17 = arith.constant 0 : index
      %16 = vector.load %arg8[%c0_16, %c0_17] : memref<2x4xf32, #tpu.memory_space<vmem>>, vector<2x4xf32>
      %cst_18 = arith.constant 3.906250e-03 : f32
      %17 = vector.broadcast %cst_18 : f32 to vector<2x4xf32>
      %18 = arith.mulf %16, %17 : vector<2x4xf32>
      %c0_19 = arith.constant 0 : index
      %c0_20 = arith.constant 0 : index
      %19 = vector.load %arg2[%c0_19, %c0_20] : memref<4x8xf32, #tpu.memory_space<vmem>>, vector<4x8xf32>
      %c0_21 = arith.constant 0 : index
      %c0_22 = arith.constant 0 : index
      %20 = vector.load %arg3[%c0_21, %c0_22] : memref<1x8xf32, #tpu.memory_space<vmem>>, vector<1x8xf32>
      %c0_23 = arith.constant 0 : index
      %c0_24 = arith.constant 0 : index
      %21 = vector.load %arg4[%c0_23, %c0_24] : memref<8x4xf32, #tpu.memory_space<vmem>>, vector<8x4xf32>
      %c0_25 = arith.constant 0 : index
      %c0_26 = arith.constant 0 : index
      %22 = vector.load %arg5[%c0_25, %c0_26] : memref<1x4xf32, #tpu.memory_space<vmem>>, vector<1x4xf32>
      %cst_27 = arith.constant dense<0.000000e+00> : vector<2x8xf32>
      %23 = tpu.matmul %15, %19, %cst_27 {dimension_numbers = #tpu.dot_dimension_numbers<[1], [0], [0], [1], [0, 0, 1, 1], [], []>} : vector<2x4xf32>, vector<4x8xf32>, vector<2x8xf32> -> vector<2x8xf32>
      %24 = vector.broadcast %20 : vector<1x8xf32> to vector<2x8xf32>
      %25 = arith.addf %23, %24 : vector<2x8xf32>
      %cst_28 = arith.constant 0.000000e+00 : f32
      %26 = vector.broadcast %cst_28 : f32 to vector<2x8xf32>
      %27 = arith.maximumf %25, %26 : vector<2x8xf32>
      %cst_29 = arith.constant dense<0.000000e+00> : vector<2x8xf32>
      %28 = tpu.matmul %18, %19, %cst_29 {dimension_numbers = #tpu.dot_dimension_numbers<[1], [0], [0], [1], [0, 0, 1, 1], [], []>} : vector<2x4xf32>, vector<4x8xf32>, vector<2x8xf32> -> vector<2x8xf32>
      %29 = vector.broadcast %20 : vector<1x8xf32> to vector<2x8xf32>
      %30 = arith.addf %28, %29 : vector<2x8xf32>
      %cst_30 = arith.constant 0.000000e+00 : f32
      %31 = vector.broadcast %cst_30 : f32 to vector<2x8xf32>
      %32 = arith.maximumf %30, %31 : vector<2x8xf32>
      %33 = arith.addf %27, %32 : vector<2x8xf32>
      %cst_31 = arith.constant dense<0.000000e+00> : vector<2x4xf32>
      %34 = tpu.matmul %33, %21, %cst_31 {dimension_numbers = #tpu.dot_dimension_numbers<[1], [0], [0], [1], [0, 0, 1, 1], [], []>} : vector<2x8xf32>, vector<8x4xf32>, vector<2x4xf32> -> vector<2x4xf32>
      %cst_32 = arith.constant 2.000000e+00 : f32
      %35 = vector.broadcast %cst_32 : f32 to vector<1x4xf32>
      %36 = arith.mulf %35, %22 : vector<1x4xf32>
      %37 = vector.broadcast %36 : vector<1x4xf32> to vector<2x4xf32>
      %38 = arith.addf %34, %37 : vector<2x4xf32>
      %39 = arith.negf %38 : vector<2x4xf32>
      %40 = math.exp %39 : vector<2x4xf32>
      %cst_33 = arith.constant 1.000000e+00 : f32
      %41 = vector.broadcast %cst_33 : f32 to vector<2x4xf32>
      %42 = arith.addf %41, %40 : vector<2x4xf32>
      %43 = arith.divf %41, %42 : vector<2x4xf32>
      %c0_34 = arith.constant 0 : index
      %c0_35 = arith.constant 0 : index
      %44 = vector.load %arg6[%c0_34, %c0_35] : memref<2x4xf32, #tpu.memory_space<vmem>>, vector<2x4xf32>
      tpu.vector_store %arg6[%c0_34, %c0_35], %43 {strides = array<i32>} : memref<2x4xf32, #tpu.memory_space<vmem>>, vector<2x4xf32>,
    } else {
    }
    return
  }
  func.func @transform_0(%arg0: i32) -> (i32, i32, i32) {
    %c0_i32 = arith.constant 0 : i32
    %c0_i32_0 = arith.constant 0 : i32
    %c0_i32_1 = arith.constant 0 : i32
    return %c0_i32, %c0_i32_0, %arg0 : i32, i32, i32
  }
  func.func @transform_1(%arg0: i32) -> (i32, i32) {
    %c0_i32 = arith.constant 0 : i32
    %c0_i32_0 = arith.constant 0 : i32
    %c0_i32_1 = arith.constant 0 : i32
    return %c0_i32, %c0_i32_0 : i32, i32
  }
  func.func @transform_2(%arg0: i32) -> (i32, i32) {
    %c0_i32 = arith.constant 0 : i32
    %c0_i32_0 = arith.constant 0 : i32
    %c0_i32_1 = arith.constant 0 : i32
    return %c0_i32, %c0_i32_0 : i32, i32
  }
  func.func @transform_3(%arg0: i32) -> (i32, i32) {
    %c0_i32 = arith.constant 0 : i32
    %c0_i32_0 = arith.constant 0 : i32
    %c0_i32_1 = arith.constant 0 : i32
    return %c0_i32, %c0_i32_0 : i32, i32
  }
  func.func @transform_4(%arg0: i32) -> (i32, i32) {
    %c0_i32 = arith.constant 0 : i32
    %c0_i32_0 = arith.constant 0 : i32
    %c0_i32_1 = arith.constant 0 : i32
    return %c0_i32, %c0_i32_0 : i32, i32
  }
  func.func @transform_5(%arg0: i32) -> (i32, i32) {
    %c0_i32 = arith.constant 0 : i32
    %c0_i32_0 = arith.constant 0 : i32
    %c0_i32_1 = arith.constant 0 : i32
    return %c0_i32, %c0_i32_0 : i32, i32
  }
}

</mosaic_0001>

<llo_original>
// kernel: tpu_custom_call.1
$region0: #{tpu_custom_call.1}
  #allocation0 [shape = 'u32[]', space=smem, size = 0x4, offset = 0x4, fixed_abs, tag = 'smem constant byte address 0x4 - core index']
  #allocation1 [shape = 'u32[144,128]{1,0:T(1,128)}', space=vmem, size = 0x12000, scoped, tag = 'internal scratch']
  #allocation2 [shape = 'f32[2,4]{1,0:T(2,128)}', space=vmem, size = 0x400, scoped, tag = 'scratch operand']
  #allocation3 [shape = 'f32[2,4]{1,0:T(2,128)}', space=vmem, size = 0x400, scoped, tag = 'scratch operand']
  %s0 = inlined_call_operand.hbm [shape: f32[2,4,256], index: 0, kind: input, shape index: {}]
  %s1 = inlined_call_operand.vmem [shape: f32[4,8], index: 1, kind: input, shape index: {}]
  %s2 = inlined_call_operand.vmem [shape: f32[1,8], index: 2, kind: input, shape index: {}]
  %s3 = inlined_call_operand.vmem [shape: f32[8,4], index: 3, kind: input, shape index: {}]
  %s4 = inlined_call_operand.vmem [shape: f32[1,4], index: 4, kind: input, shape index: {}]
  %s5 = inlined_call_operand.hbm [shape: f32[2,4], index: 5, kind: output, shape index: {}]
  %s6 = sld [smem:[#allocation0]]
  $region42: #{tpu_custom_call.1} parent=0
    _
  %s8 = ssub.s32 1, %s6
  %s9 = scalar_select 0, %s8, %s6
  $region1: #{tpu_custom_call.1} parent=0
    #allocation4 [shape = 'u8[8192]{0}', space=vmem, size = 0x2000, scoped, tag = 'input window, operand 0, single buffered']
    #allocation5 [shape = 's32[1]{0}', space=sflag, size = 0x4, scoped, tag = 'scoped memory for tpu_custom_call.1']
    #allocation6 [shape = 's32[1]{0}', space=sflag, size = 0x4, scoped, tag = 'scoped memory for tpu_custom_call.1']
    #allocation7 [shape = 'u8[1024]{0}', space=vmem, size = 0x400, scoped, tag = 'output window, operand 0, single buffered']
    %10 = vsyncpa [#allocation5], 0
    %11 = vsyncpa [#allocation6], 0
    // Predicated region
    $region2: #{tpu_custom_call.1} parent=1 // pred_check
      _
    $region3: #{tpu_custom_call.1} parent=1 // pred_check_branch
      %13 = sbr.rel (0) target = $region5
    $region4: #{tpu_custom_call.1} parent=1 // pred_region
      %s15 = ssub.s32 256, 256
      %16 = vsyncadd [#allocation5], %s15
      %s17 = sshll.u32 [#allocation4], 4
      %s18 = int_to_ptr.vmem [resolvable:$true] %s17
      %23 = dma.hbm_to_vmem [thread:$0]  %s0, 256, %s18, [#allocation5], 128, 128, 8
    $region5: #{tpu_custom_call.1} parent=1 // pred_fallthru
      _
    // Predicated region
    $region6: #{tpu_custom_call.1} parent=1 // pred_check
      _
    $region7: #{tpu_custom_call.1} parent=1 // pred_check_branch
      %25 = sbr.rel (0) target = $region9
    $region8: #{tpu_custom_call.1} parent=1 // pred_region
      _
    $region9: #{tpu_custom_call.1} parent=1 // pred_fallthru
      _
    // Predicated region
    $region10: #{tpu_custom_call.1} parent=1 // pred_check
      _
    $region11: #{tpu_custom_call.1} parent=1 // pred_check_branch
      %27 = sbr.rel (0) target = $region13
    $region12: #{tpu_custom_call.1} parent=1 // pred_region
      _
    $region13: #{tpu_custom_call.1} parent=1 // pred_fallthru
      _
    // Predicated region
    $region14: #{tpu_custom_call.1} parent=1 // pred_check
      _
    $region15: #{tpu_custom_call.1} parent=1 // pred_check_branch
      %29 = sbr.rel (0) target = $region17
    $region16: #{tpu_custom_call.1} parent=1 // pred_region
      _
    $region17: #{tpu_custom_call.1} parent=1 // pred_fallthru
      _
    // Predicated region
    $region18: #{tpu_custom_call.1} parent=1 // pred_check
      _
    $region19: #{tpu_custom_call.1} parent=1 // pred_check_branch
      %31 = sbr.rel (0) target = $region21
    $region20: #{tpu_custom_call.1} parent=1 // pred_region
      _
    $region21: #{tpu_custom_call.1} parent=1 // pred_fallthru
      _
    // Predicated region
    $region22: #{tpu_custom_call.1} parent=1 // pred_check
      _
    $region23: #{tpu_custom_call.1} parent=1 // pred_check_branch
      %33 = sbr.rel (0) target = $region25
    $region24: #{tpu_custom_call.1} parent=1 // pred_region
      %34 = dma.done [#allocation5], 256
    $region25: #{tpu_custom_call.1} parent=1 // pred_fallthru
      _
    %p35 = scmp.eq.s32.totalorder 0, 0
    // Predicated region
    $region26: #{tpu_custom_call.1} parent=1 // pred_check
      %p36 = pneg %p35
    $region27: #{tpu_custom_call.1} parent=1 // pred_check_branch
      %38 = sbr.rel (%p36) target = $region29
    $region28: #{tpu_custom_call.1} parent=1 // pred_region
      %vm39 = vcmask 25600
      %40 = vst.msk [vmem:[#allocation2] sm:$0x3] %vm39, -inf
      %41 = vst.msk [vmem:[#allocation3] sm:$0x3] %vm39, 0.0
    $region29: #{tpu_custom_call.1} parent=1 // pred_fallthru
      _
    %v42 = vld [vmem:[#allocation4] sm:$0xff]
    %v43 = vld [vmem:[#allocation4 + $0x8] sm:$0xff]
    %v44 = vld [vmem:[#allocation2] sm:$0x3]
    %v47 = vcombine.high %v42, %v42
    %v48 = vcombine.high %v43, %v43
    %vm51 = vcmask 1043456
    %v52 = vsel %vm51, %v42, -inf
    %v53 = vsel %vm51, %v47, -inf
    %v54 = vmax.f32 %v52, %v53
    %55 = vmax.xlane.f32.xlu0 %v54
    %v56 = vpop.xlane.xlu0 %55
    %v57 = vsel %vm51, %v43, -inf
    %v58 = vsel %vm51, %v48, -inf
    %v59 = vmax.f32 %v57, %v58
    %60 = vmax.xlane.f32.xlu0 %v59
    %v61 = vpop.xlane.xlu0 %60
    %v64 = vlaneseq
    %v65 = vand.u32 %v64, 127
    %v66 = vlaneseq
    %v67 = vshrl.u32 %v66, 7
    %v68 = vsub.s32 %v65, %v67
    %v69 = vrot.slane %v56, %v68
    %v70 = vlaneseq
    %v71 = vshrl.u32 %v70, 7
    %v72 = vsub.s32 %v65, %v71
    %v73 = vrot.slane %v61, %v72
    %vm74 = vcmask 1041409
    %v75 = vsel %vm74, %v73, %v69
    %v77 = vmax.f32 %v44, %v75
    %vm78 = vcmask 25600
    %79 = vst.msk [vmem:[#allocation2] sm:$0x3] %vm78, %v77
    %v80 = vld [vmem:[#allocation3] sm:$0x3]
    %v81 = vsel %vm51, %v42, 0.0
    %v82 = vsel %vm51, %v47, 0.0
    %v83 = vadd.f32 %v81, %v82
    %84 = vadd.xlane.f32.xlu0 %v83
    %v85 = vpop.xlane.xlu0 %84
    %v86 = vsel %vm51, %v43, 0.0
    %v87 = vsel %vm51, %v48, 0.0
    %v88 = vadd.f32 %v86, %v87
    %89 = vadd.xlane.f32.xlu0 %v88
    %v90 = vpop.xlane.xlu0 %89
    %v93 = vlaneseq
    %v94 = vshrl.u32 %v93, 7
    %v95 = vsub.s32 %v65, %v94
    %v96 = vrot.slane %v85, %v95
    %v97 = vlaneseq
    %v98 = vshrl.u32 %v97, 7
    %v99 = vsub.s32 %v65, %v98
    %v100 = vrot.slane %v90, %v99
    %v101 = vsel %vm74, %v100, %v96
    %v103 = vadd.f32 %v80, %v101
    %104 = vst.msk [vmem:[#allocation3] sm:$0x3] %vm78, %v103
    // Predicated region
    $region30: #{tpu_custom_call.1} parent=1 // pred_check
      %p105 = pneg %p35
    $region31: #{tpu_custom_call.1} parent=1 // pred_check_branch
      %107 = sbr.rel (%p105) target = $region33
    $region32: #{tpu_custom_call.1} parent=1 // pred_region
      %v108 = vld [vmem:[#allocation2] sm:$0x3]
      %v109 = vld [vmem:[#allocation3] sm:$0x3]
      %v110 = vmul.f32 %v109, 0.00390625
      %v111 = vld [vmem:[%s1] sm:$0xf]
      %v112 = vld [vmem:[%s2] sm:$0x1]
      %v113 = vld [vmem:[%s3] sm:$0xff]
      %v114 = vld [vmem:[%s4] sm:$0x1]
      %v116 = vlaneseq
      %v117 = vshrl.u32 %v116, 7
      %v118 = vsub.s32 0, %v117
      %v119 = vrot.slane %v112, %v118
      %vm121 = vcmask 31744
      %v123 = vsel %vm121, %v108, 0
      %v126 = vsel %vm51, %v111, 0
      %128 = vmatprep.subr.mxu0 0.0
      %129 = vmatpush1.msra.mxu0 0.0
      %130 = vmatprep.subr.mxu0 0.0
      %131 = vmatpush1.msra.mxu0 0.0
      %132 = vmatprep.subr.mxu0 0.0
      %133 = vmatpush1.msra.mxu0 0.0
      %134 = vmatprep.subr.mxu0 0.0
      %135 = vmatpush1.msra.mxu0 0.0
      %136 = vmatprep.subr.mxu0 0.0
      %137 = vmatpush1.msra.mxu0 0.0
      %138 = vmatprep.subr.mxu0 0.0
      %139 = vmatpush1.msra.mxu0 0.0
      %140 = vmatprep.subr.mxu0 0.0
      %141 = vmatpush1.msra.mxu0 0.0
      %142 = vmatprep.subr.mxu0 0.0
      %143 = vmatpush1.msra.mxu0 0.0
      %144 = vmatprep.subr.mxu0 0.0
      %145 = vmatpush1.msra.mxu0 0.0
      %146 = vmatprep.subr.mxu0 0.0
      %147 = vmatpush1.msra.mxu0 0.0
      %148 = vmatprep.subr.mxu0 0.0
      %149 = vmatpush1.msra.mxu0 0.0
      %150 = vmatprep.subr.mxu0 0.0
      %151 = vmatpush1.msra.mxu0 0.0
      %152 = vmatprep.subr.mxu0 0.0
      %153 = vmatpush1.msra.mxu0 0.0
      %154 = vmatprep.subr.mxu0 0.0
      %155 = vmatpush1.msra.mxu0 0.0
      %156 = vmatprep.subr.mxu0 0.0
      %157 = vmatpush1.msra.mxu0 0.0
      %158 = vmatprep.subr.mxu0 0.0
      %159 = vmatpush1.msra.mxu0 %v126
      %160 = vmatprep.subr.mxu0 0.0
      %161 = vmatpush2.msra.mxu0 0.0
      %162 = vmatprep.subr.mxu0 0.0
      %163 = vmatpush2.msra.mxu0 0.0
      %164 = vmatprep.subr.mxu0 0.0
      %165 = vmatpush2.msra.mxu0 0.0
      %166 = vmatprep.subr.mxu0 0.0
      %167 = vmatpush2.msra.mxu0 0.0
      %168 = vmatprep.subr.mxu0 0.0
      %169 = vmatpush2.msra.mxu0 0.0
      %170 = vmatprep.subr.mxu0 0.0
      %171 = vmatpush2.msra.mxu0 0.0
      %172 = vmatprep.subr.mxu0 0.0
      %173 = vmatpush2.msra.mxu0 0.0
      %174 = vmatprep.subr.mxu0 0.0
      %175 = vmatpush2.msra.mxu0 0.0
      %176 = vmatprep.subr.mxu0 0.0
      %177 = vmatpush2.msra.mxu0 0.0
      %178 = vmatprep.subr.mxu0 0.0
      %179 = vmatpush2.msra.mxu0 0.0
      %180 = vmatprep.subr.mxu0 0.0
      %181 = vmatpush2.msra.mxu0 0.0
      %182 = vmatprep.subr.mxu0 0.0
      %183 = vmatpush2.msra.mxu0 0.0
      %184 = vmatprep.subr.mxu0 0.0
      %185 = vmatpush2.msra.mxu0 0.0
      %186 = vmatprep.subr.mxu0 0.0
      %187 = vmatpush2.msra.mxu0 0.0
      %188 = vmatprep.subr.mxu0 0.0
      %189 = vmatpush2.msra.mxu0 0.0
      %190 = vmatprep.subr.mxu0 0.0
      %191 = vmatpush2.msra.mxu0 0.0
      %192 = vmatprep.mubr.f32.mxu0 0.0
      %193 = vmatmul.mubr.f32.gmra.mxu0 %v123
      %v194 = vpop.f32.mrf.mxu0
      %v195 = vadd.f32 %v119, %v194
      %v196 = vpop.f32.mrf.mxu0
      %197 = vdwg.mxu0
      %v198 = vmax.f32 %v195, 0.0
      %v200 = vsel %vm121, %v110, 0
      %202 = vmatprep.subr.mxu0 0.0
      %203 = vmatpush1.msra.mxu0 0.0
      %204 = vmatprep.subr.mxu0 0.0
      %205 = vmatpush1.msra.mxu0 0.0
      %206 = vmatprep.subr.mxu0 0.0
      %207 = vmatpush1.msra.mxu0 0.0
      %208 = vmatprep.subr.mxu0 0.0
      %209 = vmatpush1.msra.mxu0 0.0
      %210 = vmatprep.subr.mxu0 0.0
      %211 = vmatpush1.msra.mxu0 0.0
      %212 = vmatprep.subr.mxu0 0.0
      %213 = vmatpush1.msra.mxu0 0.0
      %214 = vmatprep.subr.mxu0 0.0
      %215 = vmatpush1.msra.mxu0 0.0
      %216 = vmatprep.subr.mxu0 0.0
      %217 = vmatpush1.msra.mxu0 0.0
      %218 = vmatprep.subr.mxu0 0.0
      %219 = vmatpush1.msra.mxu0 0.0
      %220 = vmatprep.subr.mxu0 0.0
      %221 = vmatpush1.msra.mxu0 0.0
      %222 = vmatprep.subr.mxu0 0.0
      %223 = vmatpush1.msra.mxu0 0.0
      %224 = vmatprep.subr.mxu0 0.0
      %225 = vmatpush1.msra.mxu0 0.0
      %226 = vmatprep.subr.mxu0 0.0
      %227 = vmatpush1.msra.mxu0 0.0
      %228 = vmatprep.subr.mxu0 0.0
      %229 = vmatpush1.msra.mxu0 0.0
      %230 = vmatprep.subr.mxu0 0.0
      %231 = vmatpush1.msra.mxu0 0.0
      %232 = vmatprep.subr.mxu0 0.0
      %233 = vmatpush1.msra.mxu0 %v126
      %234 = vmatprep.subr.mxu0 0.0
      %235 = vmatpush2.msra.mxu0 0.0
      %236 = vmatprep.subr.mxu0 0.0
      %237 = vmatpush2.msra.mxu0 0.0
      %238 = vmatprep.subr.mxu0 0.0
      %239 = vmatpush2.msra.mxu0 0.0
      %240 = vmatprep.subr.mxu0 0.0
      %241 = vmatpush2.msra.mxu0 0.0
      %242 = vmatprep.subr.mxu0 0.0
      %243 = vmatpush2.msra.mxu0 0.0
      %244 = vmatprep.subr.mxu0 0.0
      %245 = vmatpush2.msra.mxu0 0.0
      %246 = vmatprep.subr.mxu0 0.0
      %247 = vmatpush2.msra.mxu0 0.0
      %248 = vmatprep.subr.mxu0 0.0
      %249 = vmatpush2.msra.mxu0 0.0
      %250 = vmatprep.subr.mxu0 0.0
      %251 = vmatpush2.msra.mxu0 0.0
      %252 = vmatprep.subr.mxu0 0.0
      %253 = vmatpush2.msra.mxu0 0.0
      %254 = vmatprep.subr.mxu0 0.0
      %255 = vmatpush2.msra.mxu0 0.0
      %256 = vmatprep.subr.mxu0 0.0
      %257 = vmatpush2.msra.mxu0 0.0
      %258 = vmatprep.subr.mxu0 0.0
      %259 = vmatpush2.msra.mxu0 0.0
      %260 = vmatprep.subr.mxu0 0.0
      %261 = vmatpush2.msra.mxu0 0.0
      %262 = vmatprep.subr.mxu0 0.0
      %263 = vmatpush2.msra.mxu0 0.0
      %264 = vmatprep.subr.mxu0 0.0
      %265 = vmatpush2.msra.mxu0 0.0
      %266 = vmatprep.mubr.f32.mxu0 0.0
      %267 = vmatmul.mubr.f32.gmra.mxu0 %v200
      %v268 = vpop.f32.mrf.mxu0
      %v269 = vadd.f32 %v119, %v268
      %v270 = vpop.f32.mrf.mxu0
      %271 = vdwg.mxu0
      %v272 = vmax.f32 %v269, 0.0
      %v273 = vadd.f32 %v198, %v272
      %v274 = vmul.f32 %v114, 2.0
      %v276 = vlaneseq
      %v277 = vshrl.u32 %v276, 7
      %v278 = vsub.s32 0, %v277
      %v279 = vrot.slane %v274, %v278
      %vm281 = vcmask 64512
      %v283 = vsel %vm281, %v273, 0
      %285 = vmatprep.subr.mxu0 0.0
      %286 = vmatpush1.msra.mxu0 0.0
      %287 = vmatprep.subr.mxu0 0.0
      %288 = vmatpush1.msra.mxu0 0.0
      %289 = vmatprep.subr.mxu0 0.0
      %290 = vmatpush1.msra.mxu0 0.0
      %291 = vmatprep.subr.mxu0 0.0
      %292 = vmatpush1.msra.mxu0 0.0
      %293 = vmatprep.subr.mxu0 0.0
      %294 = vmatpush1.msra.mxu0 0.0
      %295 = vmatprep.subr.mxu0 0.0
      %296 = vmatpush1.msra.mxu0 0.0
      %297 = vmatprep.subr.mxu0 0.0
      %298 = vmatpush1.msra.mxu0 0.0
      %299 = vmatprep.subr.mxu0 0.0
      %300 = vmatpush1.msra.mxu0 0.0
      %301 = vmatprep.subr.mxu0 0.0
      %302 = vmatpush1.msra.mxu0 0.0
      %303 = vmatprep.subr.mxu0 0.0
      %304 = vmatpush1.msra.mxu0 0.0
      %305 = vmatprep.subr.mxu0 0.0
      %306 = vmatpush1.msra.mxu0 0.0
      %307 = vmatprep.subr.mxu0 0.0
      %308 = vmatpush1.msra.mxu0 0.0
      %309 = vmatprep.subr.mxu0 0.0
      %310 = vmatpush1.msra.mxu0 0.0
      %311 = vmatprep.subr.mxu0 0.0
      %312 = vmatpush1.msra.mxu0 0.0
      %313 = vmatprep.subr.mxu0 0.0
      %314 = vmatpush1.msra.mxu0 0.0
      %315 = vmatprep.subr.mxu0 0.0
      %316 = vmatpush1.msra.mxu0 %v113
      %317 = vmatprep.subr.mxu0 0.0
      %318 = vmatpush2.msra.mxu0 0.0
      %319 = vmatprep.subr.mxu0 0.0
      %320 = vmatpush2.msra.mxu0 0.0
      %321 = vmatprep.subr.mxu0 0.0
      %322 = vmatpush2.msra.mxu0 0.0
      %323 = vmatprep.subr.mxu0 0.0
      %324 = vmatpush2.msra.mxu0 0.0
      %325 = vmatprep.subr.mxu0 0.0
      %326 = vmatpush2.msra.mxu0 0.0
      %327 = vmatprep.subr.mxu0 0.0
      %328 = vmatpush2.msra.mxu0 0.0
      %329 = vmatprep.subr.mxu0 0.0
      %330 = vmatpush2.msra.mxu0 0.0
      %331 = vmatprep.subr.mxu0 0.0
      %332 = vmatpush2.msra.mxu0 0.0
      %333 = vmatprep.subr.mxu0 0.0
      %334 = vmatpush2.msra.mxu0 0.0
      %335 = vmatprep.subr.mxu0 0.0
      %336 = vmatpush2.msra.mxu0 0.0
      %337 = vmatprep.subr.mxu0 0.0
      %338 = vmatpush2.msra.mxu0 0.0
      %339 = vmatprep.subr.mxu0 0.0
      %340 = vmatpush2.msra.mxu0 0.0
      %341 = vmatprep.subr.mxu0 0.0
      %342 = vmatpush2.msra.mxu0 0.0
      %343 = vmatprep.subr.mxu0 0.0
      %344 = vmatpush2.msra.mxu0 0.0
      %345 = vmatprep.subr.mxu0 0.0
      %346 = vmatpush2.msra.mxu0 0.0
      %347 = vmatprep.subr.mxu0 0.0
      %348 = vmatpush2.msra.mxu0 0.0
      %349 = vmatprep.mubr.f32.mxu0 0.0
      %350 = vmatmul.mubr.f32.gmra.mxu0 %v283
      %v351 = vpop.f32.mrf.mxu0
      %v352 = vadd.f32 %v279, %v351
      %v353 = vpop.f32.mrf.mxu0
      %354 = vdwg.mxu0
      %v355 = vxor.u32 %v352, 2147483648
      %v356 = vmul.f32 %v355, 1.442695
      %v357 = vpow.pop %v356
      %v358 = vadd.f32 %v357, 1.0
      %v359 = vrcp.pop %v358
      %v360 = vmul.f32 1.0, %v359
      %361 = vst.msk [vmem:[#allocation7] sm:$0x3] %vm78, %v360
    $region33: #{tpu_custom_call.1} parent=1 // pred_fallthru
      _
    // Predicated region
    $region34: #{tpu_custom_call.1} parent=1 // pred_check
      _
    $region35: #{tpu_custom_call.1} parent=1 // pred_check_branch
      %363 = sbr.rel (0) target = $region37
    $region36: #{tpu_custom_call.1} parent=1 // pred_region
      %s365 = ssub.s32 32, 32
      %366 = vsyncadd [#allocation6], %s365
      %s368 = sshll.u32 [#allocation7], 4
      %s369 = int_to_ptr.vmem [resolvable:$true] %s368
      %371 = dma.vmem_to_hbm [thread:$0]  %s369, 32, %s5, [#allocation6]
    $region37: #{tpu_custom_call.1} parent=1 // pred_fallthru
      _
    // Predicated region
    $region38: #{tpu_custom_call.1} parent=1 // pred_check
      _
    $region39: #{tpu_custom_call.1} parent=1 // pred_check_branch
      %373 = sbr.rel (0) target = $region41
    $region40: #{tpu_custom_call.1} parent=1 // pred_region
      %374 = dma.done [#allocation6], 32
    $region41: #{tpu_custom_call.1} parent=1 // pred_fallthru
      _
    %375 = vsyncpa [#allocation5], 1
    %376 = vsyncpa [#allocation6], 1

</llo_original>
